<compile_context>
chip_gen: v6e
topology: v6e:2x2x1
jax: 0.10.0
libtpu: 0.0.40
codegen_flags: <defaults>
</compile_context>

<pallas_src>
import functools
from typing import NamedTuple, Optional

import jax
import jax.numpy as jnp
from jax.experimental import pallas as pl
from jax.experimental.pallas import tpu as pltpu


# ----------------------------------------------------------------------------- helpers

def _ffn_hidden_dim(dim, hidden_dim, multiple_of, ffn_dim_multiplier):
    hidden_dim = int(2 * hidden_dim / 3)
    if ffn_dim_multiplier is not None:
        hidden_dim = int(ffn_dim_multiplier * hidden_dim)
    hidden_dim = multiple_of * ((hidden_dim + multiple_of - 1) // multiple_of)
    return hidden_dim


def _round_up(x, m):
    return (x + m - 1) // m * m


def _tpu_vmem_bytes():
    """Per-TensorCore VMEM capacity; conservative 64 MiB fallback (v7x)."""
    try:
        return int(pltpu.get_tpu_info().vmem_capacity_bytes)
    except Exception:
        return 64 * 1024 * 1024


# ----------------------------------------------------------------------------- kernel

def _norm_ffn_residual_norm_kernel(h_ref, ffn_nw_ref, w13_ref, w2_ref, attn_nw_ref,
                                   o_ref, x_ref, acc_ref,
                                   *, eps, true_dim, matmul_dtype):
    k = pl.program_id(1)
    th = w2_ref.shape[0]          # hidden tile size of this block
    inv_dim = 1.0 / true_dim      # divide by the un-padded feature dim (padding is zero)

    @pl.when(k == 0)
    def _init():
        h = h_ref[...].astype(jnp.float32)
        # RMSNorm #1 (ffn_norm), f32 math. Cached x is stored in matmul_dtype (bf16 by
        # default) — intended tradeoff: both FFN matmuls see bf16 inputs.
        ms = jnp.sum(h * h, axis=-1, keepdims=True) * inv_dim
        x = h * jax.lax.rsqrt(ms + eps) * ffn_nw_ref[...]
        x_ref[...] = x.astype(matmul_dtype)
        acc_ref[...] = jnp.zeros_like(acc_ref)

    # Fused gate/up matmul for this hidden block: (tm, dim) @ (dim, 2*th) -> [h1 | h3]
    x = x_ref[...]
    hh = jnp.dot(x, w13_ref[...], preferred_element_type=jnp.float32)
    h1 = hh[:, :th]               # 128-aligned slices -> views, no extra VMEM traffic
    h3 = hh[:, th:]
    gated = jax.nn.silu(h1) * h3  # logistic on the EUP, f32 elementwise
    acc_ref[...] += jnp.dot(gated.astype(matmul_dtype), w2_ref[...],
                            preferred_element_type=jnp.float32)

    @pl.when(k == pl.num_programs(1) - 1)
    def _finalize():
        h = h_ref[...].astype(jnp.float32)
        y = h + acc_ref[...]                       # residual, f32
        # RMSNorm #2 (attn_norm)
        ms2 = jnp.sum(y * y, axis=-1, keepdims=True) * inv_dim
        o_ref[...] = (y * jax.lax.rsqrt(ms2 + eps) * attn_nw_ref[...]).astype(o_ref.dtype)


# ----------------------------------------------------------------------------- weight packing (run ONCE at init)

class PackedFFNWeights(NamedTuple):
    ffn_nw: jax.Array      # (1, dim_p) f32
    w13: jax.Array         # (dim_p, nk * 2 * th) matmul_dtype, gate/up interleaved per block
    w2: jax.Array          # (hidden_p, dim_p) matmul_dtype
    attn_nw: jax.Array     # (1, dim_p) f32
    dim: int
    dim_p: int
    hidden: int
    hidden_p: int
    th: int
    nk: int


def pack_norm_ffn_weights(ffn_norm_w, w1_t, w3_t, w2_t, attn_norm_w,
                          *, th: Optional[int] = None,
                          matmul_dtype=jnp.bfloat16) -> PackedFFNWeights:
    """Pad + interleave + cast the FFN/norm weights once (hoisted out of the forward path).

    w1_t/w3_t: (dim, hidden), w2_t: (hidden, dim)  (torch Linear weights transposed).
    """
    # TODO(synk): fp8 weight storage with per-block scales would halve weight streaming
    # again on v7x (fp8 MXU); not implemented here.
    dim, hidden = w1_t.shape
    dim_p = _round_up(dim, 128)

    if th is None:
        th = 512 if _tpu_vmem_bytes() >= 96 * 1024 * 1024 else 256
    th = max(128, _round_up(min(th, _round_up(hidden, 128)), 128))
    hidden_p = _round_up(hidden, th)
    nk = hidden_p // th

    ffn_nw = jnp.pad(ffn_norm_w.astype(jnp.float32), (0, dim_p - dim)).reshape(1, dim_p)
    attn_nw = jnp.pad(attn_norm_w.astype(jnp.float32), (0, dim_p - dim)).reshape(1, dim_p)

    w1_p = jnp.pad(w1_t, ((0, dim_p - dim), (0, hidden_p - hidden)))
    w3_p = jnp.pad(w3_t, ((0, dim_p - dim), (0, hidden_p - hidden)))
    w2_p = jnp.pad(w2_t, ((0, hidden_p - hidden), (0, dim_p - dim))).astype(matmul_dtype)

    # Interleave gate/up weights at hidden-block granularity: block k of w13 is
    # [w1[:, k*th:(k+1)*th] | w3[:, k*th:(k+1)*th]] so the kernel does one matmul per step.
    w13 = jnp.stack(
        [w1_p.reshape(dim_p, nk, th), w3_p.reshape(dim_p, nk, th)], axis=2
    ).reshape(dim_p, nk * 2 * th).astype(matmul_dtype)

    return PackedFFNWeights(ffn_nw, w13, w2_p, attn_nw,
                            dim, dim_p, hidden, hidden_p, th, nk)


# ----------------------------------------------------------------------------- forward with pre-packed weights

def norm_ffn_residual_norm_packed(h, packed: PackedFFNWeights, *, eps=1e-6,
                                  tm: Optional[int] = None):
    """h: (B, S, dim). `packed` from pack_norm_ffn_weights()."""
    B, S, dim = h.shape
    assert dim == packed.dim, "feature dim mismatch with packed weights"
    dim_p, th, nk, hidden_p = packed.dim_p, packed.th, packed.nk, packed.hidden_p
    matmul_dtype = packed.w13.dtype
    tokens = B * S

    vmem_cap = _tpu_vmem_bytes()
    if tm is None:
        tm = 512 if vmem_cap >= 96 * 1024 * 1024 else 384

    # ---- token tile: multiple of 8, at least 2 tiles when the batch allows (megacore) ----
    tm = max(8, _round_up(min(tm, _round_up(tokens, 8)), 8))
    if _round_up(tokens, tm) // tm < 2 and tokens > 8:
        tm = max(8, _round_up((tokens + 1) // 2, 8))

    w_itemsize = jnp.dtype(matmul_dtype).itemsize
    act_itemsize = jnp.dtype(h.dtype).itemsize

    def _vmem_bytes(tm_, wbufs):
        weight_block = (dim_p * 2 * th + th * dim_p) * w_itemsize   # w13 + w2 block
        acts = 2 * tm_ * dim_p * 2 * act_itemsize                   # double-buffered h + out
        scratch = tm_ * dim_p * (4 + w_itemsize)                    # f32 acc + cached x
        return wbufs * weight_block + acts + scratch + 4 * dim_p * 4

    # Shrink the token tile until the working set fits comfortably on this chip.
    while _vmem_bytes(tm, 2) > 0.8 * vmem_cap and tm > 8:
        tm = max(8, _round_up(tm // 2, 8))

    tokens_p = _round_up(tokens, tm)
    n_tok_tiles = tokens_p // tm

    # Optional third weight buffer on 128-MiB chips (v5e/v6e) when the grid is long enough.
    wbufs = 2
    if (vmem_cap >= 112 * 1024 * 1024 and nk >= 2 and n_tok_tiles * nk >= 6
            and _vmem_bytes(tm, 3) <= 0.8 * vmem_cap):
        wbufs = 3
    weight_pipe = {} if wbufs == 2 else {"pipeline_mode": pl.Buffered(wbufs)}

    h2d = jnp.pad(h.reshape(tokens, dim),
                  ((0, tokens_p - tokens), (0, dim_p - dim)))

    # Weight blocks are re-fetched for every token tile (their index_maps depend only on k).
    weight_bytes = (packed.w13.size + packed.w2.size) * w_itemsize
    cost = pl.CostEstimate(
        flops=int(6 * tokens_p * dim_p * hidden_p),
        transcendentals=int(tokens_p * hidden_p + 2 * tokens_p),
        bytes_accessed=int(weight_bytes * n_tok_tiles
                           + 2 * tokens_p * dim_p * act_itemsize
                           + 2 * dim_p * 4),
    )

    vmem_limit = int(min(max(int(1.25 * _vmem_bytes(tm, wbufs)), 16 * 1024 * 1024),
                         int(0.85 * vmem_cap)))

    kernel = functools.partial(_norm_ffn_residual_norm_kernel,
                               eps=eps, true_dim=dim, matmul_dtype=matmul_dtype)

    out = pl.pallas_call(
        kernel,
        out_shape=jax.ShapeDtypeStruct((tokens_p, dim_p), h.dtype),
        grid_spec=pltpu.PrefetchScalarGridSpec(
            num_scalar_prefetch=0,
            grid=(n_tok_tiles, nk),
            in_specs=[
                pl.BlockSpec((tm, dim_p), lambda i, k: (i, 0)),                    # h tile
                pl.BlockSpec((1, dim_p), lambda i, k: (0, 0)),                     # ffn_norm w
                pl.BlockSpec((dim_p, 2 * th), lambda i, k: (0, k), **weight_pipe),  # [w1|w3] blk
                pl.BlockSpec((th, dim_p), lambda i, k: (k, 0), **weight_pipe),      # w2 blk
                pl.BlockSpec((1, dim_p), lambda i, k: (0, 0)),                     # attn_norm w
            ],
            out_specs=pl.BlockSpec((tm, dim_p), lambda i, k: (i, 0)),
            scratch_shapes=[
                pltpu.VMEM((tm, dim_p), matmul_dtype),   # cached normalized x
                pltpu.VMEM((tm, dim_p), jnp.float32),    # FFN output accumulator
            ],
        ),
        compiler_params=pltpu.CompilerParams(
            dimension_semantics=("parallel", "arbitrary"),
            vmem_limit_bytes=vmem_limit,
        ),
        cost_estimate=cost,
    )(h2d, packed.ffn_nw, packed.w13, packed.w2, packed.attn_nw)

    return out[:tokens, :dim].reshape(B, S, dim)


def norm_ffn_residual_norm(h, ffn_norm_w, w1_t, w3_t, w2_t, attn_norm_w,
                           *, eps=1e-6, tm=None, th=None,
                           matmul_dtype=jnp.bfloat16):
    """Convenience wrapper: packs weights then runs (prefer pre-packing once at init)."""
    packed = pack_norm_ffn_weights(ffn_norm_w, w1_t, w3_t, w2_t, attn_norm_w,
                                   th=th, matmul_dtype=matmul_dtype)
    return norm_ffn_residual_norm_packed(h, packed, eps=eps, tm=tm)


# ----------------------------------------------------------------------------- reference

def _reference(h, ffn_norm_w, w1_t, w3_t, w2_t, attn_norm_w, eps=1e-6):
    def rms(x, w):
        ms = jnp.mean(x * x, axis=-1, keepdims=True)
        return x * jax.lax.rsqrt(ms + eps) * w
    x = rms(h, ffn_norm_w)
    h1 = x @ w1_t
    h3 = x @ w3_t
    ffn = (jax.nn.silu(h1) * h3) @ w2_t
    y = h + ffn
    return rms(y, attn_norm_w)


# ----------------------------------------------------------------------------- demo

if __name__ == "__main__":
    # Module config (small, consistent with the torch module's __init__)
    dim = 32
    hidden_dim_arg = 64
    multiple_of = 16
    ffn_dim_multiplier = None
    hidden = _ffn_hidden_dim(dim, hidden_dim_arg, multiple_of, ffn_dim_multiplier)  # -> 48

    B, S = 2, 8

    key = jax.random.PRNGKey(0)
    k_h, k_w1, k_w2, k_w3 = jax.random.split(key, 4)

    h = jax.random.normal(k_h, (B, S, dim), dtype=jnp.float32)

    # FeedForward weights: torch Linear weight is (out, in); stored transposed (in, out).
    # TODO(synk): torch uses trunc_normal_ init; plain normal used here (synthetic weights).
    w1_t = 0.02 * jax.random.normal(k_w1, (dim, hidden), dtype=jnp.float32)
    w3_t = 0.02 * jax.random.normal(k_w3, (dim, hidden), dtype=jnp.float32)
    w2_t = 0.02 * jax.random.normal(k_w2, (hidden, dim), dtype=jnp.float32)

    # RMSNorm weights init to ones (as in the module).
    ffn_norm_w = jnp.ones((dim,), dtype=jnp.float32)
    attn_norm_w = jnp.ones((dim,), dtype=jnp.float32)

    ref = _reference(h, ffn_norm_w, w1_t, w3_t, w2_t, attn_norm_w)

    # Default path: bf16 matmul inputs (weights pre-packed once), f32 accumulation/elementwise.
    packed_bf16 = pack_norm_ffn_weights(ffn_norm_w, w1_t, w3_t, w2_t, attn_norm_w,
                                        matmul_dtype=jnp.bfloat16)
    out_bf16 = norm_ffn_residual_norm_packed(h, packed_bf16)
    out_bf16 = jax.block_until_ready(out_bf16)
    assert out_bf16.shape == (B, S, dim)
    assert jnp.allclose(out_bf16, ref, atol=5e-2, rtol=5e-2), "bf16 mismatch vs reference"

    # f32 matmul path (exact vs reference).
    out_f32 = norm_ffn_residual_norm(h, ffn_norm_w, w1_t, w3_t, w2_t, attn_norm_w,
                                     matmul_dtype=jnp.float32)
    out_f32 = jax.block_until_ready(out_f32)
    assert out_f32.shape == (B, S, dim)
    assert jnp.allclose(out_f32, ref, atol=1e-5, rtol=1e-5), "f32 mismatch vs reference"

    print("KERNEL_OK")
</pallas_src>

<mosaic_0001>
module attributes {stable_mosaic.version = 11 : i64} {
  func.func @_norm_ffn_residual_norm_kernel(%arg0: i32, %arg1: i32, %arg2: memref<8x128xf32, #tpu.memory_space<vmem>>, %arg3: memref<1x128xf32, #tpu.memory_space<vmem>>, %arg4: memref<128x256xbf16, #tpu.memory_space<vmem>>, %arg5: memref<128x128xbf16, #tpu.memory_space<vmem>>, %arg6: memref<1x128xf32, #tpu.memory_space<vmem>>, %arg7: memref<8x128xf32, #tpu.memory_space<vmem>>, %arg8: memref<8x128xbf16, #tpu.memory_space<vmem>>, %arg9: memref<8x128xf32, #tpu.memory_space<vmem>>) attributes {dimension_semantics = [#tpu.dimension_semantics<parallel>, #tpu.dimension_semantics<arbitrary>], iteration_bounds = array<i64: 2, 1>, scalar_prefetch = 0 : i64, scratch_operands = 2 : i64, tpu.core_type = #tpu.core_type<tc>, window_params = [{transform_indices = @transform_0, window_bounds = array<i64: 8, 128>}, {pipeline_mode = #tpu.pipeline_mode<synchronous>, transform_indices = @transform_1, window_bounds = array<i64: 1, 128>}, {transform_indices = @transform_2, window_bounds = array<i64: 128, 256>}, {transform_indices = @transform_3, window_bounds = array<i64: 128, 128>}, {pipeline_mode = #tpu.pipeline_mode<synchronous>, transform_indices = @transform_4, window_bounds = array<i64: 1, 128>}, {transform_indices = @transform_5, window_bounds = array<i64: 8, 128>}]} {
    %c0_i32 = arith.constant 0 : i32
    %0 = arith.cmpi eq, %arg1, %c0_i32 : i32
    %1 = arith.extui %0 : i1 to i32
    %c0_i32_0 = arith.constant 0 : i32
    %2 = arith.cmpi ne, %1, %c0_i32_0 : i32
    scf.if %2 {
      %c0_14 = arith.constant 0 : index
      %c0_15 = arith.constant 0 : index
      %24 = vector.load %arg2[%c0_14, %c0_15] : memref<8x128xf32, #tpu.memory_space<vmem>>, vector<8x128xf32>
      %25 = arith.mulf %24, %24 : vector<8x128xf32>
      %cst_16 = arith.constant dense<0.000000e+00> : vector<8xf32>
      %26 = vector.multi_reduction <add>, %25, %cst_16 [1] : vector<8x128xf32> to vector<8xf32>
      %27 = vector.shape_cast %26 : vector<8xf32> to vector<8x1xf32>
      %cst_17 = arith.constant 3.125000e-02 : f32
      %28 = vector.broadcast %cst_17 : f32 to vector<8x1xf32>
      %29 = arith.mulf %27, %28 : vector<8x1xf32>
      %cst_18 = arith.constant 9.99999997E-7 : f32
      %30 = vector.broadcast %cst_18 : f32 to vector<8x1xf32>
      %31 = arith.addf %29, %30 : vector<8x1xf32>
      %32 = math.rsqrt %31 : vector<8x1xf32>
      %33 = vector.broadcast %32 : vector<8x1xf32> to vector<8x128xf32>
      %34 = arith.mulf %24, %33 : vector<8x128xf32>
      %c0_19 = arith.constant 0 : index
      %c0_20 = arith.constant 0 : index
      %35 = vector.load %arg3[%c0_19, %c0_20] : memref<1x128xf32, #tpu.memory_space<vmem>>, vector<1x128xf32>
      %36 = vector.broadcast %35 : vector<1x128xf32> to vector<8x128xf32>
      %37 = arith.mulf %34, %36 : vector<8x128xf32>
      %38 = arith.truncf %37 : vector<8x128xf32> to vector<8x128xbf16>
      %c0_21 = arith.constant 0 : index
      %c0_22 = arith.constant 0 : index
      %39 = vector.load %arg8[%c0_21, %c0_22] : memref<8x128xbf16, #tpu.memory_space<vmem>>, vector<8x128xbf16>
      tpu.vector_store %arg8[%c0_21, %c0_22], %38 {strides = array<i32>} : memref<8x128xbf16, #tpu.memory_space<vmem>>, vector<8x128xbf16>,
      %cst_23 = arith.constant 0.000000e+00 : f32
      %40 = vector.broadcast %cst_23 : f32 to vector<8x128xf32>
      %c0_24 = arith.constant 0 : index
      %c0_25 = arith.constant 0 : index
      %41 = vector.load %arg9[%c0_24, %c0_25] : memref<8x128xf32, #tpu.memory_space<vmem>>, vector<8x128xf32>
      tpu.vector_store %arg9[%c0_24, %c0_25], %40 {strides = array<i32>} : memref<8x128xf32, #tpu.memory_space<vmem>>, vector<8x128xf32>,
    } else {
    }
    %c0 = arith.constant 0 : index
    %c0_1 = arith.constant 0 : index
    %3 = vector.load %arg8[%c0, %c0_1] : memref<8x128xbf16, #tpu.memory_space<vmem>>, vector<8x128xbf16>
    %c0_2 = arith.constant 0 : index
    %c0_3 = arith.constant 0 : index
    %4 = vector.load %arg4[%c0_2, %c0_3] : memref<128x256xbf16, #tpu.memory_space<vmem>>, vector<128x256xbf16>
    %cst = arith.constant dense<0.000000e+00> : vector<8x256xf32>
    %5 = tpu.matmul %3, %4, %cst {dimension_numbers = #tpu.dot_dimension_numbers<[1], [0], [0], [1], [0, 0, 1, 1], [], []>} : vector<8x128xbf16>, vector<128x256xbf16>, vector<8x256xf32> -> vector<8x256xf32>
    %6 = vector.extract_strided_slice %5 {offsets = [0, 0], sizes = [8, 128], strides = [1, 1]} : vector<8x256xf32> to vector<8x128xf32>
    %7 = vector.extract_strided_slice %5 {offsets = [0, 128], sizes = [8, 128], strides = [1, 1]} : vector<8x256xf32> to vector<8x128xf32>
    %8 = arith.negf %6 : vector<8x128xf32>
    %9 = math.exp %8 : vector<8x128xf32>
    %cst_4 = arith.constant 1.000000e+00 : f32
    %10 = vector.broadcast %cst_4 : f32 to vector<8x128xf32>
    %11 = arith.addf %10, %9 : vector<8x128xf32>
    %12 = arith.divf %10, %11 : vector<8x128xf32>
    %13 = arith.mulf %6, %12 : vector<8x128xf32>
    %14 = arith.mulf %13, %7 : vector<8x128xf32>
    %c0_5 = arith.constant 0 : index
    %c0_6 = arith.constant 0 : index
    %15 = vector.load %arg9[%c0_5, %c0_6] : memref<8x128xf32, #tpu.memory_space<vmem>>, vector<8x128xf32>
    %16 = arith.truncf %14 : vector<8x128xf32> to vector<8x128xbf16>
    %c0_7 = arith.constant 0 : index
    %c0_8 = arith.constant 0 : index
    %17 = vector.load %arg5[%c0_7, %c0_8] : memref<128x128xbf16, #tpu.memory_space<vmem>>, vector<128x128xbf16>
    %cst_9 = arith.constant dense<0.000000e+00> : vector<8x128xf32>
    %18 = tpu.matmul %16, %17, %cst_9 {dimension_numbers = #tpu.dot_dimension_numbers<[1], [0], [0], [1], [0, 0, 1, 1], [], []>} : vector<8x128xbf16>, vector<128x128xbf16>, vector<8x128xf32> -> vector<8x128xf32>
    %19 = arith.addf %15, %18 : vector<8x128xf32>
    %c0_10 = arith.constant 0 : index
    %c0_11 = arith.constant 0 : index
    %20 = vector.load %arg9[%c0_10, %c0_11] : memref<8x128xf32, #tpu.memory_space<vmem>>, vector<8x128xf32>
    tpu.vector_store %arg9[%c0_10, %c0_11], %19 {strides = array<i32>} : memref<8x128xf32, #tpu.memory_space<vmem>>, vector<8x128xf32>,
    %c0_i32_12 = arith.constant 0 : i32
    %21 = arith.cmpi eq, %arg1, %c0_i32_12 : i32
    %22 = arith.extui %21 : i1 to i32
    %c0_i32_13 = arith.constant 0 : i32
    %23 = arith.cmpi ne, %22, %c0_i32_13 : i32
    scf.if %23 {
      %c0_14 = arith.constant 0 : index
      %c0_15 = arith.constant 0 : index
      %24 = vector.load %arg2[%c0_14, %c0_15] : memref<8x128xf32, #tpu.memory_space<vmem>>, vector<8x128xf32>
      %c0_16 = arith.constant 0 : index
      %c0_17 = arith.constant 0 : index
      %25 = vector.load %arg9[%c0_16, %c0_17] : memref<8x128xf32, #tpu.memory_space<vmem>>, vector<8x128xf32>
      %26 = arith.addf %24, %25 : vector<8x128xf32>
      %27 = arith.mulf %26, %26 : vector<8x128xf32>
      %cst_18 = arith.constant dense<0.000000e+00> : vector<8xf32>
      %28 = vector.multi_reduction <add>, %27, %cst_18 [1] : vector<8x128xf32> to vector<8xf32>
      %29 = vector.shape_cast %28 : vector<8xf32> to vector<8x1xf32>
      %cst_19 = arith.constant 3.125000e-02 : f32
      %30 = vector.broadcast %cst_19 : f32 to vector<8x1xf32>
      %31 = arith.mulf %29, %30 : vector<8x1xf32>
      %cst_20 = arith.constant 9.99999997E-7 : f32
      %32 = vector.broadcast %cst_20 : f32 to vector<8x1xf32>
      %33 = arith.addf %31, %32 : vector<8x1xf32>
      %34 = math.rsqrt %33 : vector<8x1xf32>
      %35 = vector.broadcast %34 : vector<8x1xf32> to vector<8x128xf32>
      %36 = arith.mulf %26, %35 : vector<8x128xf32>
      %c0_21 = arith.constant 0 : index
      %c0_22 = arith.constant 0 : index
      %37 = vector.load %arg6[%c0_21, %c0_22] : memref<1x128xf32, #tpu.memory_space<vmem>>, vector<1x128xf32>
      %38 = vector.broadcast %37 : vector<1x128xf32> to vector<8x128xf32>
      %39 = arith.mulf %36, %38 : vector<8x128xf32>
      %c0_23 = arith.constant 0 : index
      %c0_24 = arith.constant 0 : index
      %40 = vector.load %arg7[%c0_23, %c0_24] : memref<8x128xf32, #tpu.memory_space<vmem>>, vector<8x128xf32>
      tpu.vector_store %arg7[%c0_23, %c0_24], %39 {strides = array<i32>} : memref<8x128xf32, #tpu.memory_space<vmem>>, vector<8x128xf32>,
    } else {
    }
    return
  }
  func.func @transform_0(%arg0: i32, %arg1: i32) -> (i32, i32) {
    %c0_i32 = arith.constant 0 : i32
    %c0_i32_0 = arith.constant 0 : i32
    return %arg0, %c0_i32 : i32, i32
  }
  func.func @transform_1(%arg0: i32, %arg1: i32) -> (i32, i32) {
    %c0_i32 = arith.constant 0 : i32
    %c0_i32_0 = arith.constant 0 : i32
    %c0_i32_1 = arith.constant 0 : i32
    return %c0_i32, %c0_i32_0 : i32, i32
  }
  func.func @transform_2(%arg0: i32, %arg1: i32) -> (i32, i32) {
    %c0_i32 = arith.constant 0 : i32
    %c0_i32_0 = arith.constant 0 : i32
    return %c0_i32, %arg1 : i32, i32
  }
  func.func @transform_3(%arg0: i32, %arg1: i32) -> (i32, i32) {
    %c0_i32 = arith.constant 0 : i32
    %c0_i32_0 = arith.constant 0 : i32
    return %arg1, %c0_i32 : i32, i32
  }
  func.func @transform_4(%arg0: i32, %arg1: i32) -> (i32, i32) {
    %c0_i32 = arith.constant 0 : i32
    %c0_i32_0 = arith.constant 0 : i32
    %c0_i32_1 = arith.constant 0 : i32
    return %c0_i32, %c0_i32_0 : i32, i32
  }
  func.func @transform_5(%arg0: i32, %arg1: i32) -> (i32, i32) {
    %c0_i32 = arith.constant 0 : i32
    %c0_i32_0 = arith.constant 0 : i32
    return %arg0, %c0_i32 : i32, i32
  }
}

</mosaic_0001>

<llo_original>
// kernel: tpu_custom_call.1
$region0: #{tpu_custom_call.1}
  #allocation0 [shape = 'u32[]', space=smem, size = 0x4, offset = 0x4, fixed_abs, tag = 'smem constant byte address 0x4 - core index']
  #allocation1 [shape = 'u32[144,128]{1,0:T(1,128)}', space=vmem, size = 0x12000, scoped, tag = 'internal scratch']
  #allocation2 [shape = 'bf16[8,128]{1,0:T(8,128)(2,1)}', space=vmem, size = 0x800, scoped, tag = 'scratch operand']
  #allocation3 [shape = 'f32[8,128]{1,0:T(8,128)}', space=vmem, size = 0x1000, scoped, tag = 'scratch operand']
  %s0 = inlined_call_operand.hbm [shape: f32[16,128], index: 0, kind: input, shape index: {}]
  %s1 = inlined_call_operand.vmem [shape: f32[1,128], index: 1, kind: input, shape index: {}]
  %s2 = inlined_call_operand.hbm [shape: bf16[128,256], index: 2, kind: input, shape index: {}]
  %s3 = inlined_call_operand.hbm [shape: bf16[128,128], index: 3, kind: input, shape index: {}]
  %s4 = inlined_call_operand.vmem [shape: f32[1,128], index: 4, kind: input, shape index: {}]
  %s5 = inlined_call_operand.hbm [shape: f32[16,128], index: 5, kind: output, shape index: {}]
  %s6 = sld [smem:[#allocation0]]
  $region73: #{tpu_custom_call.1} parent=0
    _
  %s8 = ssub.s32 1, %s6
  %s9 = scalar_select 0, %s8, %s6
  $region1: #{tpu_custom_call.1} parent=0
    #allocation4 [shape = 'u8[8192]{0}', space=vmem, size = 0x2000, scoped, tag = 'input window, operand 0']
    #allocation5 [shape = 's32[2]{0}', space=sflag, size = 0x8, scoped, tag = 'scoped memory for tpu_custom_call.1']
    #allocation6 [shape = 's32[2]{0}', space=sflag, size = 0x8, scoped, tag = 'scoped memory for tpu_custom_call.1']
    #allocation7 [shape = 'u8[65536]{0}', space=vmem, size = 0x10000, scoped, tag = 'input window, operand 2, single buffered']
    #allocation8 [shape = 's32[1]{0}', space=sflag, size = 0x4, scoped, tag = 'scoped memory for tpu_custom_call.1']
    #allocation9 [shape = 'u8[32768]{0}', space=vmem, size = 0x8000, scoped, tag = 'input window, operand 3, single buffered']
    #allocation10 [shape = 'u8[8192]{0}', space=vmem, size = 0x2000, scoped, tag = 'output window, operand 0']
    %10 = vsyncpa [#allocation5], 0
    %s11 = scalar_lea.sflag [#allocation5], 1
    %12 = vsyncpa %s11, 0
    %13 = vsyncpa [#allocation8], 0
    %14 = vsyncpa [#allocation6], 0
    %s15 = scalar_lea.sflag [#allocation6], 1
    %16 = vsyncpa %s15, 0
    loop: start=0, step=1, limit=4
    $region2: #{tpu_custom_call.1} parent=1 // loop_pre_header
      _
    $region3: #{tpu_custom_call.1} parent=1 // loop_header
      %s18 = sphi 0, %s22
      %p19 = scmp.ge.s32.totalorder %s18, 4
      %s25 = sphi 0, %s37
      %s26 = sphi 0, %s33
      %s27 = sphi 0, %s25
      %s28 = sphi 0, %s26
      %s29 = sphi 0, %s27
      %s30 = sphi 0, %s28
      %s40 = sphi 0, %s42
      %s43 = sphi 0, %s40
      %s44 = sphi 0, %s43
      %s60 = sphi 0, %s44
      %s64 = sphi 0, %s64
      %s66 = sphi 0, %s64
      %s67 = sphi 0, %s66
      %s81 = sphi 0, %s67
      %s87 = sphi 0, %s89
      %s90 = sphi 0, %s87
      %s91 = sphi 0, %s90
      %s107 = sphi 0, %s91
      %s113 = sphi 0, %s115
      %s116 = sphi 0, %s113
      %s117 = sphi 0, %s116
      %s133 = sphi 0, %s117
      %s137 = sphi 0, %s137
      %s139 = sphi 0, %s137
      %s140 = sphi 0, %s139
      %s154 = sphi 0, %s140
      %s160 = sphi 0, %s162
      %s163 = sphi 0, %s160
      %s164 = sphi 0, %s163
      %s180 = sphi 0, %s164
    $region4: #{tpu_custom_call.1} parent=1 // loop_header_branch
      %21 = sbr.rel (%p19) target = $region8
    $region5: #{tpu_custom_call.1} parent=1 // loop_body
      %s23 = ssub.s32 %s18, 1
      %s24 = ssub.s32 %s18, 2
      %s31 = sadd.s32 1, %s26
      %p32 = scmp.ge.s32.totalorder %s31, 1
      %s33 = scalar_select %p32, 0, %s31
      %s34 = sadd.s32 1, %s25
      %s35 = scalar_select %p32, %s34, %s25
      %p36 = scmp.ge.s32.totalorder %s35, 2
      %s37 = scalar_select %p36, 0, %s35
      %s38 = ssub.s32 %s25, %s37
      %p39 = scmp.eq.s32.totalorder %s38, 0
      %s41 = sadd.s32 %s40, 1
      %s42 = scalar_select %p39, %s40, %s41
      %p45 = pneg %p39
      %p46 = scmp.eq.s32.totalorder %s18, 1
      %p47 = por %p45, %p46
      %p48 = scmp.ne.s32.totalorder %s40, %s43
      %p49 = scmp.eq.s32.totalorder %s18, 0
      %p50 = por %p48, %p49
      %p51 = scmp.ne.s32.totalorder %s40, %s43
      %p52 = scmp.eq.s32.totalorder %s23, 1
      %p53 = por %p51, %p52
      %p54 = scmp.ne.s32.totalorder %s43, %s44
      %p55 = scmp.eq.s32.totalorder %s23, 0
      %p56 = por %p54, %p55
      %p57 = scmp.ne.s32.totalorder %s43, %s44
      %p58 = scmp.eq.s32.totalorder %s24, 1
      %p59 = por %p57, %p58
      %p61 = scmp.ne.s32.totalorder %s44, %s60
      %p62 = scmp.eq.s32.totalorder %s24, 0
      %p63 = por %p61, %p62
      %s65 = sadd.s32 %s64, 1
      %p68 = scmp.eq.s32.totalorder %s18, 1
      %p69 = scmp.ne.s32.totalorder %s64, %s66
      %p70 = scmp.eq.s32.totalorder %s18, 0
      %p71 = por %p69, %p70
      %p72 = scmp.ne.s32.totalorder %s64, %s66
      %p73 = scmp.eq.s32.totalorder %s23, 1
      %p74 = por %p72, %p73
      %p75 = scmp.ne.s32.totalorder %s66, %s67
      %p76 = scmp.eq.s32.totalorder %s23, 0
      %p77 = por %p75, %p76
      %p78 = scmp.ne.s32.totalorder %s66, %s67
      %p79 = scmp.eq.s32.totalorder %s24, 1
      %p80 = por %p78, %p79
      %p82 = scmp.ne.s32.totalorder %s67, %s81
      %p83 = scmp.eq.s32.totalorder %s24, 0
      %p84 = por %p82, %p83
      %s85 = ssub.s32 %s26, %s33
      %p86 = scmp.eq.s32.totalorder %s85, 0
      %s88 = sadd.s32 %s87, 1
      %s89 = scalar_select %p86, %s87, %s88
      %p92 = pneg %p86
      %p93 = scmp.eq.s32.totalorder %s18, 1
      %p94 = por %p92, %p93
      %p95 = scmp.ne.s32.totalorder %s87, %s90
      %p96 = scmp.eq.s32.totalorder %s18, 0
      %p97 = por %p95, %p96
      %p98 = scmp.ne.s32.totalorder %s87, %s90
      %p99 = scmp.eq.s32.totalorder %s23, 1
      %p100 = por %p98, %p99
      %p101 = scmp.ne.s32.totalorder %s90, %s91
      %p102 = scmp.eq.s32.totalorder %s23, 0
      %p103 = por %p101, %p102
      %p104 = scmp.ne.s32.totalorder %s90, %s91
      %p105 = scmp.eq.s32.totalorder %s24, 1
      %p106 = por %p104, %p105
      %p108 = scmp.ne.s32.totalorder %s91, %s107
      %p109 = scmp.eq.s32.totalorder %s24, 0
      %p110 = por %p108, %p109
      %s111 = ssub.s32 %s26, %s33
      %p112 = scmp.eq.s32.totalorder %s111, 0
      %s114 = sadd.s32 %s113, 1
      %s115 = scalar_select %p112, %s113, %s114
      %p118 = pneg %p112
      %p119 = scmp.eq.s32.totalorder %s18, 1
      %p120 = por %p118, %p119
      %p121 = scmp.ne.s32.totalorder %s113, %s116
      %p122 = scmp.eq.s32.totalorder %s18, 0
      %p123 = por %p121, %p122
      %p124 = scmp.ne.s32.totalorder %s113, %s116
      %p125 = scmp.eq.s32.totalorder %s23, 1
      %p126 = por %p124, %p125
      %p127 = scmp.ne.s32.totalorder %s116, %s117
      %p128 = scmp.eq.s32.totalorder %s23, 0
      %p129 = por %p127, %p128
      %p130 = scmp.ne.s32.totalorder %s116, %s117
      %p131 = scmp.eq.s32.totalorder %s24, 1
      %p132 = por %p130, %p131
      %p134 = scmp.ne.s32.totalorder %s117, %s133
      %p135 = scmp.eq.s32.totalorder %s24, 0
      %p136 = por %p134, %p135
      %s138 = sadd.s32 %s137, 1
      %p141 = scmp.eq.s32.totalorder %s18, 1
      %p142 = scmp.ne.s32.totalorder %s137, %s139
      %p143 = scmp.eq.s32.totalorder %s18, 0
      %p144 = por %p142, %p143
      %p145 = scmp.ne.s32.totalorder %s137, %s139
      %p146 = scmp.eq.s32.totalorder %s23, 1
      %p147 = por %p145, %p146
      %p148 = scmp.ne.s32.totalorder %s139, %s140
      %p149 = scmp.eq.s32.totalorder %s23, 0
      %p150 = por %p148, %p149
      %p151 = scmp.ne.s32.totalorder %s139, %s140
      %p152 = scmp.eq.s32.totalorder %s24, 1
      %p153 = por %p151, %p152
      %p155 = scmp.ne.s32.totalorder %s140, %s154
      %p156 = scmp.eq.s32.totalorder %s24, 0
      %p157 = por %p155, %p156
      %s158 = ssub.s32 %s25, %s37
      %p159 = scmp.eq.s32.totalorder %s158, 0
      %s161 = sadd.s32 %s160, 1
      %s162 = scalar_select %p159, %s160, %s161
      %p165 = pneg %p159
      %p166 = scmp.eq.s32.totalorder %s18, 1
      %p167 = por %p165, %p166
      %p168 = scmp.ne.s32.totalorder %s160, %s163
      %p169 = scmp.eq.s32.totalorder %s18, 0
      %p170 = por %p168, %p169
      %p171 = scmp.ne.s32.totalorder %s160, %s163
      %p172 = scmp.eq.s32.totalorder %s23, 1
      %p173 = por %p171, %p172
      %p174 = scmp.ne.s32.totalorder %s163, %s164
      %p175 = scmp.eq.s32.totalorder %s23, 0
      %p176 = por %p174, %p175
      %p177 = scmp.ne.s32.totalorder %s163, %s164
      %p178 = scmp.eq.s32.totalorder %s24, 1
      %p179 = por %p177, %p178
      %p181 = scmp.ne.s32.totalorder %s164, %s180
      %p182 = scmp.eq.s32.totalorder %s24, 0
      %p183 = por %p181, %p182
      %p184 = scmp.le.s32.totalorder 1, %s18
      %p185 = scmp.lt.s32.totalorder %s18, 3
      %p186 = pnand %p184, %p185
      %p187 = pneg %p186
      // Predicated region
      $region9: #{tpu_custom_call.1} parent=5 // pred_check
        _
      $region10: #{tpu_custom_call.1} parent=5 // pred_check_branch
        %189 = sbr.rel (%p186) target = $region12
      $region11: #{tpu_custom_call.1} parent=5 // pred_region
        %s190 = ssub.s32 %s18, 1
        // Predicated region
        $region13: #{tpu_custom_call.1} parent=11 // pred_check
          %p191 = pneg %p77
        $region14: #{tpu_custom_call.1} parent=11 // pred_check_branch
          %193 = sbr.rel (%p191) target = $region16
        $region15: #{tpu_custom_call.1} parent=11 // pred_region
          _
        $region16: #{tpu_custom_call.1} parent=11 // pred_fallthru
          _
        // Predicated region
        $region17: #{tpu_custom_call.1} parent=11 // pred_check
          %p194 = pneg %p103
        $region18: #{tpu_custom_call.1} parent=11 // pred_check_branch
          %196 = sbr.rel (%p194) target = $region20
        $region19: #{tpu_custom_call.1} parent=11 // pred_region
          %s197 = smul.u32 2, %s28
          %s199 = ssub.s32 2048, 2048
          %200 = vsyncadd [#allocation8], %s199
          %s201 = smul.addr %s197, 64
          %s202 = scalar_lea.hbm %s2, %s201
          %s203 = sshll.u32 [#allocation7], 4
          %s204 = int_to_ptr.vmem [resolvable:$true] %s203
          %209 = dma.hbm_to_vmem [thread:$0]  %s202, 2048, %s204, [#allocation8], 128, 128, 8
        $region20: #{tpu_custom_call.1} parent=11 // pred_fallthru
          _
        // Predicated region
        $region21: #{tpu_custom_call.1} parent=11 // pred_check
          %p210 = pneg %p129
        $region22: #{tpu_custom_call.1} parent=11 // pred_check_branch
          %212 = sbr.rel (%p210) target = $region24
        $region23: #{tpu_custom_call.1} parent=11 // pred_region
          %s213 = smul.u32 16, %s28
          %s215 = ssub.s32 1024, 1024
          %216 = vsyncadd [#allocation8], %s215
          %s217 = smul.addr %s213, 64
          %s218 = scalar_lea.hbm %s3, %s217
          %s219 = sshll.u32 [#allocation9], 4
          %s220 = int_to_ptr.vmem [resolvable:$true] %s219
          %225 = dma.hbm_to_vmem [thread:$0]  %s218, 1024, %s220, [#allocation8], 64, 64, 4
        $region24: #{tpu_custom_call.1} parent=11 // pred_fallthru
          _
        // Predicated region
        $region25: #{tpu_custom_call.1} parent=11 // pred_check
          %p226 = pneg %p150
        $region26: #{tpu_custom_call.1} parent=11 // pred_check_branch
          %228 = sbr.rel (%p226) target = $region28
        $region27: #{tpu_custom_call.1} parent=11 // pred_region
          _
        $region28: #{tpu_custom_call.1} parent=11 // pred_fallthru
          _
      $region12: #{tpu_custom_call.1} parent=5 // pred_fallthru
        _
      %p229 = scmp.lt.s32.totalorder %s18, 2
      // Predicated region
      $region29: #{tpu_custom_call.1} parent=5 // pred_check
        %p230 = pneg %p229
      $region30: #{tpu_custom_call.1} parent=5 // pred_check_branch
        %232 = sbr.rel (%p230) target = $region32
      $region31: #{tpu_custom_call.1} parent=5 // pred_region
        // Predicated region
        $region33: #{tpu_custom_call.1} parent=31 // pred_check
          %p233 = pneg %p50
        $region34: #{tpu_custom_call.1} parent=31 // pred_check_branch
          %235 = sbr.rel (%p233) target = $region36
        $region35: #{tpu_custom_call.1} parent=31 // pred_region
          %s236 = sand.u32 %s40, 1
          %s237 = scalar_lea.sflag [#allocation5], %s236
          %s238 = sand.u32 %s40, 1
          %s239 = smul.addr %s238, 8
          %s240 = scalar_lea.vmem [#allocation4], %s239
          %s242 = ssub.s32 128, 128
          %243 = vsyncadd %s237, %s242
          %s244 = smul.addr %s25, 128
          %s245 = scalar_lea.hbm %s0, %s244
          %s247 = sshll.u32 %s240, 4
          %s248 = int_to_ptr.vmem [resolvable:$true] %s247
          %250 = dma.hbm_to_vmem [thread:$0]  %s245, 128, %s248, %s237
        $region36: #{tpu_custom_call.1} parent=31 // pred_fallthru
          _
      $region32: #{tpu_custom_call.1} parent=5 // pred_fallthru
        _
      %p251 = scmp.le.s32.totalorder 1, %s18
      %p252 = scmp.lt.s32.totalorder %s18, 3
      %p253 = pnand %p251, %p252
      %p254 = pneg %p253
      // Predicated region
      $region37: #{tpu_custom_call.1} parent=5 // pred_check
        _
      $region38: #{tpu_custom_call.1} parent=5 // pred_check_branch
        %256 = sbr.rel (%p253) target = $region40
      $region39: #{tpu_custom_call.1} parent=5 // pred_region
        %s257 = ssub.s32 %s18, 1
        %s258 = sand.u32 %s43, 1
        %s259 = scalar_lea.sflag [#allocation5], %s258
        %s260 = sand.u32 %s43, 1
        %s261 = smul.addr %s260, 8
        %s262 = scalar_lea.vmem [#allocation4], %s261
        // Predicated region
        $region41: #{tpu_custom_call.1} parent=39 // pred_check
          %p263 = pneg %p56
        $region42: #{tpu_custom_call.1} parent=39 // pred_check_branch
          %265 = sbr.rel (%p263) target = $region44
        $region43: #{tpu_custom_call.1} parent=39 // pred_region
          %266 = dma.done %s259, 128
        $region44: #{tpu_custom_call.1} parent=39 // pred_fallthru
          _
        // Predicated region
        $region45: #{tpu_custom_call.1} parent=39 // pred_check
          %p267 = pneg %p103
        $region46: #{tpu_custom_call.1} parent=39 // pred_check_branch
          %269 = sbr.rel (%p267) target = $region48
        $region47: #{tpu_custom_call.1} parent=39 // pred_region
          %270 = dma.done [#allocation8], 2048
        $region48: #{tpu_custom_call.1} parent=39 // pred_fallthru
          _
        // Predicated region
        $region49: #{tpu_custom_call.1} parent=39 // pred_check
          %p271 = pneg %p129
        $region50: #{tpu_custom_call.1} parent=39 // pred_check_branch
          %273 = sbr.rel (%p271) target = $region52
        $region51: #{tpu_custom_call.1} parent=39 // pred_region
          %274 = dma.done [#allocation8], 1024
        $region52: #{tpu_custom_call.1} parent=39 // pred_fallthru
          _
        %s275 = sand.u32 %s43, 1
        %s276 = scalar_lea.sflag [#allocation5], %s275
        %s277 = sand.u32 %s43, 1
        %s278 = smul.addr %s277, 8
        %s279 = scalar_lea.vmem [#allocation4], %s278
        %p280 = pneg %p56
        %p281 = pneg %p53
        %p282 = pneg %p77
        %p283 = pneg %p74
        %p284 = pneg %p103
        %p285 = pneg %p100
        %p286 = pneg %p129
        %p287 = pneg %p126
        %p288 = pneg %p150
        %p289 = pneg %p147
        %p290 = pneg %p176
        %p291 = pneg %p173
        %s292 = sand.u32 %s163, 1
        %s293 = scalar_lea.sflag [#allocation6], %s292
        %s294 = sand.u32 %s163, 1
        %s295 = smul.addr %s294, 8
        %s296 = scalar_lea.vmem [#allocation10], %s295
        %s297 = smul.u32 2, %s28
        %s298 = smul.u32 16, %s28
        %p300 = scmp.eq.s32.totalorder %s28, 0
        // Predicated region
        $region53: #{tpu_custom_call.1} parent=39 // pred_check
          %p301 = pneg %p300
        $region54: #{tpu_custom_call.1} parent=39 // pred_check_branch
          %303 = sbr.rel (%p301) target = $region56
        $region55: #{tpu_custom_call.1} parent=39 // pred_region
          %v304 = vld [vmem:[%s262] sm:$0xff]
          %v305 = vmul.f32 %v304, %v304
          %306 = vadd.xlane.f32.xlu0 %v305
          %v307 = vpop.xlane.xlu0 %306
          %v308 = vmul.f32 %v307, 0.03125
          %v309 = vadd.f32 %v308, 1e-06
          %v310 = vrsqrt.pop %v309
          %v311 = vmul.f32 %v304, %v310
          %v312 = vld [vmem:[%s1] sm:$0x1]
          %v314 = vlaneseq
          %v315 = vshrl.u32 %v314, 7
          %v316 = vsub.s32 0, %v315
          %v317 = vrot.slane %v312, %v316
          %v319 = vmul.f32 %v311, %v317
          %v320 = vpack.c.bf16 %v319, %v319
          %321 = vst [vmem:[#allocation2] sm:$0xf] %v320
          %322 = vst [vmem:[#allocation3] sm:$0xff] 0.0
        $region56: #{tpu_custom_call.1} parent=39 // pred_fallthru
          _
        %v323 = vld [vmem:[#allocation2] sm:$0xf]
        %v324 = vld [vmem:[#allocation7] sm:$0xff]
        %v325 = vld [vmem:[#allocation7 + $0x8] sm:$0xff]
        %v326 = vld [vmem:[#allocation7 + $0x10] sm:$0xff]
        %v327 = vld [vmem:[#allocation7 + $0x18] sm:$0xff]
        %v328 = vld [vmem:[#allocation7 + $0x20] sm:$0xff]
        %v329 = vld [vmem:[#allocation7 + $0x28] sm:$0xff]
        %v330 = vld [vmem:[#allocation7 + $0x30] sm:$0xff]
        %v331 = vld [vmem:[#allocation7 + $0x38] sm:$0xff]
        %v332 = vld [vmem:[#allocation7 + $0x40] sm:$0xff]
        %v333 = vld [vmem:[#allocation7 + $0x48] sm:$0xff]
        %v334 = vld [vmem:[#allocation7 + $0x50] sm:$0xff]
        %v335 = vld [vmem:[#allocation7 + $0x58] sm:$0xff]
        %v336 = vld [vmem:[#allocation7 + $0x60] sm:$0xff]
        %v337 = vld [vmem:[#allocation7 + $0x68] sm:$0xff]
        %v338 = vld [vmem:[#allocation7 + $0x70] sm:$0xff]
        %v339 = vld [vmem:[#allocation7 + $0x78] sm:$0xff]
        %v356 = vunpack.c.l.b16 %v324
        %v357 = vunpack.c.h.b16 %v324
        %v358 = vunpack.c.l.b16 %v325
        %v359 = vunpack.c.h.b16 %v325
        %v360 = vunpack.c.l.b16 %v326
        %v361 = vunpack.c.h.b16 %v326
        %v362 = vunpack.c.l.b16 %v327
        %v363 = vunpack.c.h.b16 %v327
        %v364 = vunpack.c.l.b16 %v328
        %v365 = vunpack.c.h.b16 %v328
        %v366 = vunpack.c.l.b16 %v329
        %v367 = vunpack.c.h.b16 %v329
        %v368 = vunpack.c.l.b16 %v330
        %v369 = vunpack.c.h.b16 %v330
        %v370 = vunpack.c.l.b16 %v331
        %v371 = vunpack.c.h.b16 %v331
        %v372 = vunpack.c.l.b16 %v332
        %v373 = vunpack.c.h.b16 %v332
        %v374 = vunpack.c.l.b16 %v333
        %v375 = vunpack.c.h.b16 %v333
        %v376 = vunpack.c.l.b16 %v334
        %v377 = vunpack.c.h.b16 %v334
        %v378 = vunpack.c.l.b16 %v335
        %v379 = vunpack.c.h.b16 %v335
        %v380 = vunpack.c.l.b16 %v336
        %v381 = vunpack.c.h.b16 %v336
        %v382 = vunpack.c.l.b16 %v337
        %v383 = vunpack.c.h.b16 %v337
        %v384 = vunpack.c.l.b16 %v338
        %v385 = vunpack.c.h.b16 %v338
        %v386 = vunpack.c.l.b16 %v339
        %v387 = vunpack.c.h.b16 %v339
        %v388 = vpack.c.b16 %v358, %v356
        %v389 = vpack.c.b16 %v359, %v357
        %v390 = vpack.c.b16 %v362, %v360
        %v391 = vpack.c.b16 %v363, %v361
        %v392 = vpack.c.b16 %v366, %v364
        %v393 = vpack.c.b16 %v367, %v365
        %v394 = vpack.c.b16 %v370, %v368
        %v395 = vpack.c.b16 %v371, %v369
        %v396 = vpack.c.b16 %v374, %v372
        %v397 = vpack.c.b16 %v375, %v373
        %v398 = vpack.c.b16 %v378, %v376
        %v399 = vpack.c.b16 %v379, %v377
        %v400 = vpack.c.b16 %v382, %v380
        %v401 = vpack.c.b16 %v383, %v381
        %v402 = vpack.c.b16 %v386, %v384
        %v403 = vpack.c.b16 %v387, %v385
        %420 = vmatprep.subr.bf16.mxu0 %v403
        %421 = vmatpush1.bf16.msra.mxu0 %v402
        %422 = vmatprep.subr.bf16.mxu0 %v401
        %423 = vmatpush1.bf16.msra.mxu0 %v400
        %424 = vmatprep.subr.bf16.mxu0 %v399
        %425 = vmatpush1.bf16.msra.mxu0 %v398
        %426 = vmatprep.subr.bf16.mxu0 %v397
        %427 = vmatpush1.bf16.msra.mxu0 %v396
        %428 = vmatprep.subr.bf16.mxu0 %v395
        %429 = vmatpush1.bf16.msra.mxu0 %v394
        %430 = vmatprep.subr.bf16.mxu0 %v393
        %431 = vmatpush1.bf16.msra.mxu0 %v392
        %432 = vmatprep.subr.bf16.mxu0 %v391
        %433 = vmatpush1.bf16.msra.mxu0 %v390
        %434 = vmatprep.subr.bf16.mxu0 %v389
        %435 = vmatpush1.bf16.msra.mxu0 %v388
        %436 = vmatprep.subr.bf16.mxu0 0
        %437 = vmatpush2.bf16.msra.mxu0 0
        %438 = vmatprep.subr.bf16.mxu0 0
        %439 = vmatpush2.bf16.msra.mxu0 0
        %440 = vmatprep.subr.bf16.mxu0 0
        %441 = vmatpush2.bf16.msra.mxu0 0
        %442 = vmatprep.subr.bf16.mxu0 0
        %443 = vmatpush2.bf16.msra.mxu0 0
        %444 = vmatprep.subr.bf16.mxu0 0
        %445 = vmatpush2.bf16.msra.mxu0 0
        %446 = vmatprep.subr.bf16.mxu0 0
        %447 = vmatpush2.bf16.msra.mxu0 0
        %448 = vmatprep.subr.bf16.mxu0 0
        %449 = vmatpush2.bf16.msra.mxu0 0
        %450 = vmatprep.subr.bf16.mxu0 0
        %451 = vmatpush2.bf16.msra.mxu0 0
        %452 = vmatprep.mubr.bf16.mxu0 0
        %453 = vmatmul.mubr.bf16.gmra.mxu0 %v323
        %v454 = vpop.f32.mrf.mxu0
        %v455 = vadd.f32 0.0, %v454
        %v456 = vpop.f32.mrf.mxu0
        %v457 = vadd.f32 0.0, %v456
        %v458 = vpop.f32.mrf.mxu0
        %v459 = vpop.f32.mrf.mxu0
        %460 = vdwg.mxu0
        %v461 = vxor.u32 %v455, 2147483648
        %v462 = vmul.f32 %v461, 1.442695
        %v463 = vpow.pop %v462
        %v464 = vadd.f32 %v463, 1.0
        %v465 = vrcp.pop %v464
        %v466 = vmul.f32 1.0, %v465
        %v467 = vmul.f32 %v455, %v466
        %v468 = vmul.f32 %v467, %v457
        %v469 = vld [vmem:[#allocation3] sm:$0xff]
        %v470 = vpack.c.bf16 %v468, %v468
        %v471 = vld [vmem:[#allocation9] sm:$0xf]
        %v472 = vld [vmem:[#allocation9 + $0x4] sm:$0xf]
        %v473 = vld [vmem:[#allocation9 + $0x8] sm:$0xf]
        %v474 = vld [vmem:[#allocation9 + $0xc] sm:$0xf]
        %v475 = vld [vmem:[#allocation9 + $0x10] sm:$0xf]
        %v476 = vld [vmem:[#allocation9 + $0x14] sm:$0xf]
        %v477 = vld [vmem:[#allocation9 + $0x18] sm:$0xf]
        %v478 = vld [vmem:[#allocation9 + $0x1c] sm:$0xf]
        %v479 = vld [vmem:[#allocation9 + $0x20] sm:$0xf]
        %v480 = vld [vmem:[#allocation9 + $0x24] sm:$0xf]
        %v481 = vld [vmem:[#allocation9 + $0x28] sm:$0xf]
        %v482 = vld [vmem:[#allocation9 + $0x2c] sm:$0xf]
        %v483 = vld [vmem:[#allocation9 + $0x30] sm:$0xf]
        %v484 = vld [vmem:[#allocation9 + $0x34] sm:$0xf]
        %v485 = vld [vmem:[#allocation9 + $0x38] sm:$0xf]
        %v486 = vld [vmem:[#allocation9 + $0x3c] sm:$0xf]
        %v503 = vunpack.c.l.b16 %v471
        %v504 = vunpack.c.l.b16 %v472
        %v505 = vunpack.c.l.b16 %v473
        %v506 = vunpack.c.l.b16 %v474
        %v507 = vunpack.c.l.b16 %v475
        %v508 = vunpack.c.l.b16 %v476
        %v509 = vunpack.c.l.b16 %v477
        %v510 = vunpack.c.l.b16 %v478
        %v511 = vunpack.c.l.b16 %v479
        %v512 = vunpack.c.l.b16 %v480
        %v513 = vunpack.c.l.b16 %v481
        %v514 = vunpack.c.l.b16 %v482
        %v515 = vunpack.c.l.b16 %v483
        %v516 = vunpack.c.l.b16 %v484
        %v517 = vunpack.c.l.b16 %v485
        %v518 = vunpack.c.l.b16 %v486
        %v519 = vpack.c.b16 %v504, %v503
        %v520 = vpack.c.b16 %v506, %v505
        %v521 = vpack.c.b16 %v508, %v507
        %v522 = vpack.c.b16 %v510, %v509
        %v523 = vpack.c.b16 %v512, %v511
        %v524 = vpack.c.b16 %v514, %v513
        %v525 = vpack.c.b16 %v516, %v515
        %v526 = vpack.c.b16 %v518, %v517
        %535 = vmatprep.subr.bf16.mxu0 0
        %536 = vmatpush1.bf16.msra.mxu0 %v526
        %537 = vmatprep.subr.bf16.mxu0 0
        %538 = vmatpush1.bf16.msra.mxu0 %v525
        %539 = vmatprep.subr.bf16.mxu0 0
        %540 = vmatpush1.bf16.msra.mxu0 %v524
        %541 = vmatprep.subr.bf16.mxu0 0
        %542 = vmatpush1.bf16.msra.mxu0 %v523
        %543 = vmatprep.subr.bf16.mxu0 0
        %544 = vmatpush1.bf16.msra.mxu0 %v522
        %545 = vmatprep.subr.bf16.mxu0 0
        %546 = vmatpush1.bf16.msra.mxu0 %v521
        %547 = vmatprep.subr.bf16.mxu0 0
        %548 = vmatpush1.bf16.msra.mxu0 %v520
        %549 = vmatprep.subr.bf16.mxu0 0
        %550 = vmatpush1.bf16.msra.mxu0 %v519
        %551 = vmatprep.subr.bf16.mxu0 0
        %552 = vmatpush2.bf16.msra.mxu0 0
        %553 = vmatprep.subr.bf16.mxu0 0
        %554 = vmatpush2.bf16.msra.mxu0 0
        %555 = vmatprep.subr.bf16.mxu0 0
        %556 = vmatpush2.bf16.msra.mxu0 0
        %557 = vmatprep.subr.bf16.mxu0 0
        %558 = vmatpush2.bf16.msra.mxu0 0
        %559 = vmatprep.subr.bf16.mxu0 0
        %560 = vmatpush2.bf16.msra.mxu0 0
        %561 = vmatprep.subr.bf16.mxu0 0
        %562 = vmatpush2.bf16.msra.mxu0 0
        %563 = vmatprep.subr.bf16.mxu0 0
        %564 = vmatpush2.bf16.msra.mxu0 0
        %565 = vmatprep.subr.bf16.mxu0 0
        %566 = vmatpush2.bf16.msra.mxu0 0
        %567 = vmatprep.mubr.bf16.mxu0 0
        %568 = vmatmul.mubr.bf16.gmra.mxu0 %v470
        %v569 = vpop.f32.mrf.mxu0
        %v570 = vadd.f32 0.0, %v569
        %v571 = vpop.f32.mrf.mxu0
        %v572 = vpop.f32.mrf.mxu0
        %v573 = vpop.f32.mrf.mxu0
        %574 = vdwg.mxu0
        %v575 = vadd.f32 %v469, %v570
        %576 = vst [vmem:[#allocation3] sm:$0xff] %v575
        // Predicated region
        $region57: #{tpu_custom_call.1} parent=39 // pred_check
          %p577 = pneg %p300
        $region58: #{tpu_custom_call.1} parent=39 // pred_check_branch
          %579 = sbr.rel (%p577) target = $region60
        $region59: #{tpu_custom_call.1} parent=39 // pred_region
          %v580 = vld [vmem:[%s262] sm:$0xff]
          %v581 = vld [vmem:[#allocation3] sm:$0xff]
          %v582 = vadd.f32 %v580, %v581
          %v583 = vmul.f32 %v582, %v582
          %584 = vadd.xlane.f32.xlu0 %v583
          %v585 = vpop.xlane.xlu0 %584
          %v586 = vmul.f32 %v585, 0.03125
          %v587 = vadd.f32 %v586, 1e-06
          %v588 = vrsqrt.pop %v587
          %v589 = vmul.f32 %v582, %v588
          %v590 = vld [vmem:[%s4] sm:$0x1]
          %v592 = vlaneseq
          %v593 = vshrl.u32 %v592, 7
          %v594 = vsub.s32 0, %v593
          %v595 = vrot.slane %v590, %v594
          %v597 = vmul.f32 %v589, %v595
          %598 = vst [vmem:[%s296] sm:$0xff] %v597
        $region60: #{tpu_custom_call.1} parent=39 // pred_fallthru
          _
        %s599 = sand.u32 %s163, 1
        %s600 = scalar_lea.sflag [#allocation6], %s599
        %s601 = sand.u32 %s163, 1
        %s602 = smul.addr %s601, 8
        %s603 = scalar_lea.vmem [#allocation10], %s602
        // Predicated region
        $region61: #{tpu_custom_call.1} parent=39 // pred_check
          %p604 = pneg %p173
        $region62: #{tpu_custom_call.1} parent=39 // pred_check_branch
          %606 = sbr.rel (%p604) target = $region64
        $region63: #{tpu_custom_call.1} parent=39 // pred_region
          %s608 = ssub.s32 128, 128
          %609 = vsyncadd %s600, %s608
          %s610 = smul.addr %s27, 128
          %s611 = scalar_lea.hbm %s5, %s610
          %s613 = sshll.u32 %s603, 4
          %s614 = int_to_ptr.vmem [resolvable:$true] %s613
          %616 = dma.vmem_to_hbm [thread:$0]  %s614, 128, %s611, %s600
        $region64: #{tpu_custom_call.1} parent=39 // pred_fallthru
          _
      $region40: #{tpu_custom_call.1} parent=5 // pred_fallthru
        _
      %p617 = scmp.le.s32.totalorder 2, %s18
      // Predicated region
      $region65: #{tpu_custom_call.1} parent=5 // pred_check
        %p618 = pneg %p617
      $region66: #{tpu_custom_call.1} parent=5 // pred_check_branch
        %620 = sbr.rel (%p618) target = $region68
      $region67: #{tpu_custom_call.1} parent=5 // pred_region
        %s621 = ssub.s32 %s18, 2
        // Predicated region
        $region69: #{tpu_custom_call.1} parent=67 // pred_check
          %p622 = pneg %p179
        $region70: #{tpu_custom_call.1} parent=67 // pred_check_branch
          %624 = sbr.rel (%p622) target = $region72
        $region71: #{tpu_custom_call.1} parent=67 // pred_region
          %s625 = sand.u32 %s164, 1
          %s626 = scalar_lea.sflag [#allocation6], %s625
          %s627 = sand.u32 %s164, 1
          %s628 = smul.addr %s627, 8
          %s629 = scalar_lea.vmem [#allocation10], %s628
          %630 = dma.done %s626, 128
        $region72: #{tpu_custom_call.1} parent=67 // pred_fallthru
          _
      $region68: #{tpu_custom_call.1} parent=5 // pred_fallthru
        _
    $region6: #{tpu_custom_call.1} parent=1 // loop_footer
      %s22 = sadd.s32 1, %s18
    $region7: #{tpu_custom_call.1} parent=1 // loop_footer_branch
      %17 = sbr.rel target = $region3
    $region8: #{tpu_custom_call.1} parent=1 // loop_exit
      _
    %631 = vsyncpa [#allocation5], 1
    %s632 = scalar_lea.sflag [#allocation5], 1
    %633 = vsyncpa %s632, 1
    %634 = vsyncpa [#allocation8], 1
    %635 = vsyncpa [#allocation6], 1
    %s636 = scalar_lea.sflag [#allocation6], 1
    %637 = vsyncpa %s636, 1

</llo_original>
